<compile_context>
chip_gen: v6e
topology: v6e:2x2x1
jax: 0.10.0
libtpu: 0.0.40
codegen_flags: <defaults>
</compile_context>

<pallas_src>
import functools

import jax
import jax.numpy as jnp
from jax.experimental import pallas as pl
from jax.experimental.pallas import tpu as pltpu

LANES = 128
SUBLANES = 8
MAX_TILE_ROWS = 2048   # 2048x128 f32 = 1 MiB per input tile; 4 MiB double-buffered.
NUM_CORES = 2          # leading "parallel" grid axis (megacore split on v7x).


def _focal_kernel(pred_ref, tgt_ref, out_ref, acc_ref, *,
                  alpha, gamma, n, tile_rows, tiles_per_core):
    c = pl.program_id(0)
    i = pl.program_id(1)

    @pl.when(i == 0)
    def _():
        acc_ref[...] = jnp.zeros_like(acc_ref)

    p = pred_ref[...].astype(jnp.float32)
    t = tgt_ref[...].astype(jnp.float32)

    # BCELoss (reduction='none'); PyTorch clamps the log terms at -100.
    log_p = jnp.maximum(jnp.log(p), -100.0)
    log_1mp = jnp.maximum(jnp.log(1.0 - p), -100.0)
    bce = -(t * log_p + (1.0 - t) * log_1mp)

    # Focal modulation.
    pt = jnp.exp(-bce)
    x = jnp.maximum(1.0 - pt, 0.0)
    if gamma == 1.5:
        mod = x * jnp.sqrt(x)          # x**1.5 with a single EUP op
    elif gamma == 2.0:
        mod = x * x
    else:
        mod = jnp.power(x, gamma)
    fl = alpha * mod * bce

    # Mask out padded / out-of-range elements (ragged tail, clamped tiles).
    tile_idx = c * tiles_per_core + i          # unclamped logical tile index
    row = jax.lax.broadcasted_iota(jnp.int32, fl.shape, 0)
    lane = jax.lax.broadcasted_iota(jnp.int32, fl.shape, 1)
    gidx = tile_idx * (tile_rows * LANES) + row * LANES + lane
    fl = jnp.where(gidx < n, fl, 0.0)

    # Fold rows onto a single (8,128) vreg accumulator: pure VALU adds.
    acc_ref[...] += fl.reshape(tile_rows // SUBLANES, SUBLANES, LANES).sum(axis=0)

    @pl.when(i == pl.num_programs(1) - 1)
    def _():
        out_ref[...] = acc_ref[...]


def focal_loss_mean(pred, targets, *, alpha=0.25, gamma=1.5):
    """Focal loss with reduction='mean' (PyTorch FocalLoss defaults)."""
    assert pred.shape == targets.shape
    n = pred.size
    assert n > 0

    def _prep(x):
        x = x.reshape(-1)
        if not jnp.issubdtype(x.dtype, jnp.floating):
            x = x.astype(jnp.float32)
        pad = (-n) % (SUBLANES * LANES)
        if pad:  # only when n is not a multiple of 1024; pad values are masked in-kernel
            x = jnp.pad(x, (0, pad))
        return x.reshape(-1, LANES)

    p2d = _prep(pred)
    t2d = _prep(targets)
    rows = p2d.shape[0]                          # multiple of 8

    tile_rows = min(MAX_TILE_ROWS, rows)         # multiple of 8
    n_tiles = pl.cdiv(rows, tile_rows)
    tiles_per_core = pl.cdiv(n_tiles, NUM_CORES)

    kernel = functools.partial(
        _focal_kernel, alpha=float(alpha), gamma=float(gamma),
        n=n, tile_rows=tile_rows, tiles_per_core=tiles_per_core)

    def in_map(c, i):
        # Clamp so over-allocated (c, i) pairs re-read a valid tile; their
        # contribution is fully masked by the gidx < n check in the kernel.
        return (jnp.minimum(c * tiles_per_core + i, n_tiles - 1), 0)

    partials = pl.pallas_call(
        kernel,
        out_shape=jax.ShapeDtypeStruct((NUM_CORES * SUBLANES, LANES), jnp.float32),
        grid_spec=pltpu.PrefetchScalarGridSpec(
            num_scalar_prefetch=0,
            grid=(NUM_CORES, tiles_per_core),
            in_specs=[
                pl.BlockSpec((tile_rows, LANES), in_map),
                pl.BlockSpec((tile_rows, LANES), in_map),
            ],
            out_specs=pl.BlockSpec((SUBLANES, LANES), lambda c, i: (c, 0)),
            scratch_shapes=[pltpu.VMEM((SUBLANES, LANES), jnp.float32)],
        ),
        compiler_params=pltpu.CompilerParams(
            dimension_semantics=("parallel", "arbitrary"),
        ),
    )(p2d, t2d)

    return jnp.sum(partials) / jnp.float32(n)


def _focal_loss_ref(pred, targets, *, alpha=0.25, gamma=1.5):
    p = pred.astype(jnp.float32)
    t = targets.astype(jnp.float32)
    bce = -(t * jnp.maximum(jnp.log(p), -100.0)
            + (1.0 - t) * jnp.maximum(jnp.log(1.0 - p), -100.0))
    pt = jnp.exp(-bce)
    fl = alpha * (1.0 - pt) ** gamma * bce
    return jnp.mean(fl)


if __name__ == "__main__":
    key = jax.random.PRNGKey(0)
    k1, k2, k3, k4 = jax.random.split(key, 4)

    # NCHW-shaped probabilities / soft targets (with_logits=False -> pred in (0,1)).
    shape = (2, 4, 16, 16)
    pred = jax.random.uniform(k1, shape, jnp.float32, minval=1e-4, maxval=1.0 - 1e-4)
    targets = (jax.random.uniform(k2, shape, jnp.float32) > 0.5).astype(jnp.float32)

    out = focal_loss_mean(pred, targets)
    out = jax.block_until_ready(out)
    ref = _focal_loss_ref(pred, targets)
    assert jnp.allclose(out, ref, rtol=1e-4, atol=1e-6), (out, ref)

    # Ragged shape exercising the pad-to-1024 + in-kernel masking path.
    shape2 = (2, 3, 7, 9)
    pred2 = jax.random.uniform(k3, shape2, jnp.float32, minval=1e-4, maxval=1.0 - 1e-4)
    targets2 = (jax.random.uniform(k4, shape2, jnp.float32) > 0.5).astype(jnp.float32)

    out2 = focal_loss_mean(pred2, targets2)
    out2 = jax.block_until_ready(out2)
    ref2 = _focal_loss_ref(pred2, targets2)
    assert jnp.allclose(out2, ref2, rtol=1e-4, atol=1e-6), (out2, ref2)

    print("KERNEL_OK")
</pallas_src>

<mosaic_0001>
module attributes {stable_mosaic.version = 11 : i64} {
  func.func @_focal_kernel(%arg0: i32, %arg1: i32, %arg2: memref<16x128xf32, #tpu.memory_space<vmem>>, %arg3: memref<16x128xf32, #tpu.memory_space<vmem>>, %arg4: memref<8x128xf32, #tpu.memory_space<vmem>>, %arg5: memref<8x128xf32, #tpu.memory_space<vmem>>) attributes {dimension_semantics = [#tpu.dimension_semantics<parallel>, #tpu.dimension_semantics<arbitrary>], iteration_bounds = array<i64: 2, 1>, scalar_prefetch = 0 : i64, scratch_operands = 1 : i64, tpu.core_type = #tpu.core_type<tc>, window_params = [{transform_indices = @transform_0, window_bounds = array<i64: 16, 128>}, {transform_indices = @transform_1, window_bounds = array<i64: 16, 128>}, {transform_indices = @transform_2, window_bounds = array<i64: 8, 128>}]} {
    %c0_i32 = arith.constant 0 : i32
    %0 = arith.cmpi eq, %arg1, %c0_i32 : i32
    %1 = arith.extui %0 : i1 to i32
    %c0_i32_0 = arith.constant 0 : i32
    %2 = arith.cmpi ne, %1, %c0_i32_0 : i32
    scf.if %2 {
      %cst_21 = arith.constant 0.000000e+00 : f32
      %54 = vector.broadcast %cst_21 : f32 to vector<8x128xf32>
      %c0_22 = arith.constant 0 : index
      %c0_23 = arith.constant 0 : index
      %55 = vector.load %arg5[%c0_22, %c0_23] : memref<8x128xf32, #tpu.memory_space<vmem>>, vector<8x128xf32>
      tpu.vector_store %arg5[%c0_22, %c0_23], %54 {strides = array<i32>} : memref<8x128xf32, #tpu.memory_space<vmem>>, vector<8x128xf32>,
    } else {
    }
    %c0 = arith.constant 0 : index
    %c0_1 = arith.constant 0 : index
    %3 = vector.load %arg2[%c0, %c0_1] : memref<16x128xf32, #tpu.memory_space<vmem>>, vector<16x128xf32>
    %c0_2 = arith.constant 0 : index
    %c0_3 = arith.constant 0 : index
    %4 = vector.load %arg3[%c0_2, %c0_3] : memref<16x128xf32, #tpu.memory_space<vmem>>, vector<16x128xf32>
    %5 = math.log %3 : vector<16x128xf32>
    %cst = arith.constant -1.000000e+02 : f32
    %6 = vector.broadcast %cst : f32 to vector<16x128xf32>
    %7 = arith.maximumf %5, %6 : vector<16x128xf32>
    %cst_4 = arith.constant 1.000000e+00 : f32
    %8 = vector.broadcast %cst_4 : f32 to vector<16x128xf32>
    %9 = arith.subf %8, %3 : vector<16x128xf32>
    %10 = math.log %9 : vector<16x128xf32>
    %cst_5 = arith.constant -1.000000e+02 : f32
    %11 = vector.broadcast %cst_5 : f32 to vector<16x128xf32>
    %12 = arith.maximumf %10, %11 : vector<16x128xf32>
    %13 = arith.mulf %4, %7 : vector<16x128xf32>
    %cst_6 = arith.constant 1.000000e+00 : f32
    %14 = vector.broadcast %cst_6 : f32 to vector<16x128xf32>
    %15 = arith.subf %14, %4 : vector<16x128xf32>
    %16 = arith.mulf %15, %12 : vector<16x128xf32>
    %17 = arith.addf %13, %16 : vector<16x128xf32>
    %cst_7 = arith.constant 0.000000e+00 : f32
    %18 = vector.broadcast %cst_7 : f32 to vector<16x128xf32>
    %19 = arith.subf %18, %17 : vector<16x128xf32>
    %cst_8 = arith.constant 0.000000e+00 : f32
    %20 = vector.broadcast %cst_8 : f32 to vector<16x128xf32>
    %21 = arith.subf %20, %19 : vector<16x128xf32>
    %22 = math.exp %21 : vector<16x128xf32>
    %cst_9 = arith.constant 1.000000e+00 : f32
    %23 = vector.broadcast %cst_9 : f32 to vector<16x128xf32>
    %24 = arith.subf %23, %22 : vector<16x128xf32>
    %cst_10 = arith.constant 0.000000e+00 : f32
    %25 = vector.broadcast %cst_10 : f32 to vector<16x128xf32>
    %26 = arith.maximumf %24, %25 : vector<16x128xf32>
    %27 = math.sqrt %26 : vector<16x128xf32>
    %28 = arith.mulf %26, %27 : vector<16x128xf32>
    %cst_11 = arith.constant 2.500000e-01 : f32
    %29 = vector.broadcast %cst_11 : f32 to vector<16x128xf32>
    %30 = arith.mulf %29, %28 : vector<16x128xf32>
    %31 = arith.mulf %30, %19 : vector<16x128xf32>
    %c1_i32 = arith.constant 1 : i32
    %32 = arith.muli %arg0, %c1_i32 : i32
    %33 = arith.addi %32, %arg1 : i32
    %34 = tpu.iota {dimensions = array<i32: 0>} : vector<16x128xi32>
    %35 = tpu.iota {dimensions = array<i32: 1>} : vector<16x128xi32>
    %c2048_i32 = arith.constant 2048 : i32
    %36 = arith.muli %33, %c2048_i32 : i32
    %c128_i32 = arith.constant 128 : i32
    %37 = vector.broadcast %c128_i32 : i32 to vector<16x128xi32>
    %38 = arith.muli %34, %37 : vector<16x128xi32>
    %39 = vector.broadcast %36 : i32 to vector<16x128xi32>
    %40 = arith.addi %39, %38 : vector<16x128xi32>
    %41 = arith.addi %40, %35 : vector<16x128xi32>
    %c2048_i32_12 = arith.constant 2048 : i32
    %42 = vector.broadcast %c2048_i32_12 : i32 to vector<16x128xi32>
    %43 = arith.cmpi slt, %41, %42 : vector<16x128xi32>
    %cst_13 = arith.constant 0.000000e+00 : f32
    %44 = vector.broadcast %cst_13 : f32 to vector<16x128xf32>
    %45 = arith.select %43, %31, %44 : vector<16x128xi1>, vector<16x128xf32>
    %c0_14 = arith.constant 0 : index
    %c0_15 = arith.constant 0 : index
    %46 = vector.load %arg5[%c0_14, %c0_15] : memref<8x128xf32, #tpu.memory_space<vmem>>, vector<8x128xf32>
    %47 = vector.shape_cast %45 : vector<16x128xf32> to vector<2x8x128xf32>
    %cst_16 = arith.constant dense<0.000000e+00> : vector<8x128xf32>
    %48 = vector.multi_reduction <add>, %47, %cst_16 [0] : vector<2x8x128xf32> to vector<8x128xf32>
    %49 = arith.addf %46, %48 : vector<8x128xf32>
    %c0_17 = arith.constant 0 : index
    %c0_18 = arith.constant 0 : index
    %50 = vector.load %arg5[%c0_17, %c0_18] : memref<8x128xf32, #tpu.memory_space<vmem>>, vector<8x128xf32>
    tpu.vector_store %arg5[%c0_17, %c0_18], %49 {strides = array<i32>} : memref<8x128xf32, #tpu.memory_space<vmem>>, vector<8x128xf32>,
    %c0_i32_19 = arith.constant 0 : i32
    %51 = arith.cmpi eq, %arg1, %c0_i32_19 : i32
    %52 = arith.extui %51 : i1 to i32
    %c0_i32_20 = arith.constant 0 : i32
    %53 = arith.cmpi ne, %52, %c0_i32_20 : i32
    scf.if %53 {
      %c0_21 = arith.constant 0 : index
      %c0_22 = arith.constant 0 : index
      %54 = vector.load %arg5[%c0_21, %c0_22] : memref<8x128xf32, #tpu.memory_space<vmem>>, vector<8x128xf32>
      %c0_23 = arith.constant 0 : index
      %c0_24 = arith.constant 0 : index
      %55 = vector.load %arg4[%c0_23, %c0_24] : memref<8x128xf32, #tpu.memory_space<vmem>>, vector<8x128xf32>
      tpu.vector_store %arg4[%c0_23, %c0_24], %54 {strides = array<i32>} : memref<8x128xf32, #tpu.memory_space<vmem>>, vector<8x128xf32>,
    } else {
    }
    return
  }
  func.func @transform_0(%arg0: i32, %arg1: i32) -> (i32, i32) {
    %c1_i32 = arith.constant 1 : i32
    %0 = arith.muli %arg0, %c1_i32 : i32
    %1 = arith.addi %0, %arg1 : i32
    %c0_i32 = arith.constant 0 : i32
    %2 = arith.minsi %1, %c0_i32 : i32
    %c0_i32_0 = arith.constant 0 : i32
    %c0_i32_1 = arith.constant 0 : i32
    return %2, %c0_i32_0 : i32, i32
  }
  func.func @transform_1(%arg0: i32, %arg1: i32) -> (i32, i32) {
    %c1_i32 = arith.constant 1 : i32
    %0 = arith.muli %arg0, %c1_i32 : i32
    %1 = arith.addi %0, %arg1 : i32
    %c0_i32 = arith.constant 0 : i32
    %2 = arith.minsi %1, %c0_i32 : i32
    %c0_i32_0 = arith.constant 0 : i32
    %c0_i32_1 = arith.constant 0 : i32
    return %2, %c0_i32_0 : i32, i32
  }
  func.func @transform_2(%arg0: i32, %arg1: i32) -> (i32, i32) {
    %c0_i32 = arith.constant 0 : i32
    %c0_i32_0 = arith.constant 0 : i32
    return %arg0, %c0_i32 : i32, i32
  }
}

</mosaic_0001>

<llo_original>
// kernel: tpu_custom_call.1
$region0: #{tpu_custom_call.1}
  #allocation0 [shape = 'u32[]', space=smem, size = 0x4, offset = 0x4, fixed_abs, tag = 'smem constant byte address 0x4 - core index']
  #allocation1 [shape = 'u32[144,128]{1,0:T(1,128)}', space=vmem, size = 0x12000, scoped, tag = 'internal scratch']
  #allocation2 [shape = 'f32[8,128]{1,0:T(8,128)}', space=vmem, size = 0x1000, scoped, tag = 'scratch operand']
  %s0 = inlined_call_operand.hbm [shape: f32[16,128], index: 0, kind: input, shape index: {}]
  %s1 = inlined_call_operand.hbm [shape: f32[16,128], index: 1, kind: input, shape index: {}]
  %s2 = inlined_call_operand.hbm [shape: f32[16,128], index: 2, kind: output, shape index: {}]
  %s3 = sld [smem:[#allocation0]]
  $region57: #{tpu_custom_call.1} parent=0
    _
  %s5 = ssub.s32 1, %s3
  %s6 = scalar_select 0, %s5, %s3
  $region1: #{tpu_custom_call.1} parent=0
    #allocation3 [shape = 'u8[16384]{0}', space=vmem, size = 0x4000, scoped, tag = 'input window, operand 0']
    #allocation4 [shape = 's32[2]{0}', space=sflag, size = 0x8, scoped, tag = 'scoped memory for tpu_custom_call.1']
    #allocation5 [shape = 's32[2]{0}', space=sflag, size = 0x8, scoped, tag = 'scoped memory for tpu_custom_call.1']
    #allocation6 [shape = 'u8[16384]{0}', space=vmem, size = 0x4000, scoped, tag = 'input window, operand 1']
    #allocation7 [shape = 's32[2]{0}', space=sflag, size = 0x8, scoped, tag = 'scoped memory for tpu_custom_call.1']
    #allocation8 [shape = 'u8[8192]{0}', space=vmem, size = 0x2000, scoped, tag = 'output window, operand 0']
    %7 = vsyncpa [#allocation4], 0
    %s8 = scalar_lea.sflag [#allocation4], 1
    %9 = vsyncpa %s8, 0
    %10 = vsyncpa [#allocation7], 0
    %s11 = scalar_lea.sflag [#allocation7], 1
    %12 = vsyncpa %s11, 0
    %13 = vsyncpa [#allocation5], 0
    %s14 = scalar_lea.sflag [#allocation5], 1
    %15 = vsyncpa %s14, 0
    loop: start=0, step=1, limit=4
    $region2: #{tpu_custom_call.1} parent=1 // loop_pre_header
      _
    $region3: #{tpu_custom_call.1} parent=1 // loop_header
      %s17 = sphi 0, %s21
      %p18 = scmp.ge.s32.totalorder %s17, 4
      %s24 = sphi 0, %s36
      %s25 = sphi 0, %s32
      %s26 = sphi 0, %s24
      %s27 = sphi 0, %s25
      %s28 = sphi 0, %s26
      %s29 = sphi 0, %s27
      %s45 = sphi 0, %s47
      %s48 = sphi 0, %s45
      %s49 = sphi 0, %s48
      %s65 = sphi 0, %s49
      %s77 = sphi 0, %s79
      %s80 = sphi 0, %s77
      %s81 = sphi 0, %s80
      %s97 = sphi 0, %s81
      %s103 = sphi 0, %s105
      %s106 = sphi 0, %s103
      %s107 = sphi 0, %s106
      %s123 = sphi 0, %s107
    $region4: #{tpu_custom_call.1} parent=1 // loop_header_branch
      %20 = sbr.rel (%p18) target = $region8
    $region5: #{tpu_custom_call.1} parent=1 // loop_body
      %s22 = ssub.s32 %s17, 1
      %s23 = ssub.s32 %s17, 2
      %s30 = sadd.s32 1, %s25
      %p31 = scmp.ge.s32.totalorder %s30, 1
      %s32 = scalar_select %p31, 0, %s30
      %s33 = sadd.s32 1, %s24
      %s34 = scalar_select %p31, %s33, %s24
      %p35 = scmp.ge.s32.totalorder %s34, 2
      %s36 = scalar_select %p35, 0, %s34
      %s37 = sadd.s32 %s24, %s25
      %p38 = scmp.lt.s32.totalorder %s37, 0
      %s39 = scalar_select %p38, %s37, 0
      %s40 = sadd.s32 %s36, %s32
      %p41 = scmp.lt.s32.totalorder %s40, 0
      %s42 = scalar_select %p41, %s40, 0
      %s43 = ssub.s32 %s39, %s42
      %p44 = scmp.eq.s32.totalorder %s43, 0
      %s46 = sadd.s32 %s45, 1
      %s47 = scalar_select %p44, %s45, %s46
      %p50 = pneg %p44
      %p51 = scmp.eq.s32.totalorder %s17, 1
      %p52 = por %p50, %p51
      %p53 = scmp.ne.s32.totalorder %s45, %s48
      %p54 = scmp.eq.s32.totalorder %s17, 0
      %p55 = por %p53, %p54
      %p56 = scmp.ne.s32.totalorder %s45, %s48
      %p57 = scmp.eq.s32.totalorder %s22, 1
      %p58 = por %p56, %p57
      %p59 = scmp.ne.s32.totalorder %s48, %s49
      %p60 = scmp.eq.s32.totalorder %s22, 0
      %p61 = por %p59, %p60
      %p62 = scmp.ne.s32.totalorder %s48, %s49
      %p63 = scmp.eq.s32.totalorder %s23, 1
      %p64 = por %p62, %p63
      %p66 = scmp.ne.s32.totalorder %s49, %s65
      %p67 = scmp.eq.s32.totalorder %s23, 0
      %p68 = por %p66, %p67
      %s69 = sadd.s32 %s24, %s25
      %p70 = scmp.lt.s32.totalorder %s69, 0
      %s71 = scalar_select %p70, %s69, 0
      %s72 = sadd.s32 %s36, %s32
      %p73 = scmp.lt.s32.totalorder %s72, 0
      %s74 = scalar_select %p73, %s72, 0
      %s75 = ssub.s32 %s71, %s74
      %p76 = scmp.eq.s32.totalorder %s75, 0
      %s78 = sadd.s32 %s77, 1
      %s79 = scalar_select %p76, %s77, %s78
      %p82 = pneg %p76
      %p83 = scmp.eq.s32.totalorder %s17, 1
      %p84 = por %p82, %p83
      %p85 = scmp.ne.s32.totalorder %s77, %s80
      %p86 = scmp.eq.s32.totalorder %s17, 0
      %p87 = por %p85, %p86
      %p88 = scmp.ne.s32.totalorder %s77, %s80
      %p89 = scmp.eq.s32.totalorder %s22, 1
      %p90 = por %p88, %p89
      %p91 = scmp.ne.s32.totalorder %s80, %s81
      %p92 = scmp.eq.s32.totalorder %s22, 0
      %p93 = por %p91, %p92
      %p94 = scmp.ne.s32.totalorder %s80, %s81
      %p95 = scmp.eq.s32.totalorder %s23, 1
      %p96 = por %p94, %p95
      %p98 = scmp.ne.s32.totalorder %s81, %s97
      %p99 = scmp.eq.s32.totalorder %s23, 0
      %p100 = por %p98, %p99
      %s101 = ssub.s32 %s24, %s36
      %p102 = scmp.eq.s32.totalorder %s101, 0
      %s104 = sadd.s32 %s103, 1
      %s105 = scalar_select %p102, %s103, %s104
      %p108 = pneg %p102
      %p109 = scmp.eq.s32.totalorder %s17, 1
      %p110 = por %p108, %p109
      %p111 = scmp.ne.s32.totalorder %s103, %s106
      %p112 = scmp.eq.s32.totalorder %s17, 0
      %p113 = por %p111, %p112
      %p114 = scmp.ne.s32.totalorder %s103, %s106
      %p115 = scmp.eq.s32.totalorder %s22, 1
      %p116 = por %p114, %p115
      %p117 = scmp.ne.s32.totalorder %s106, %s107
      %p118 = scmp.eq.s32.totalorder %s22, 0
      %p119 = por %p117, %p118
      %p120 = scmp.ne.s32.totalorder %s106, %s107
      %p121 = scmp.eq.s32.totalorder %s23, 1
      %p122 = por %p120, %p121
      %p124 = scmp.ne.s32.totalorder %s107, %s123
      %p125 = scmp.eq.s32.totalorder %s23, 0
      %p126 = por %p124, %p125
      %p127 = scmp.le.s32.totalorder 1, %s17
      %p128 = scmp.lt.s32.totalorder %s17, 3
      %p129 = pnand %p127, %p128
      %p130 = pneg %p129
      // Predicated region
      $region9: #{tpu_custom_call.1} parent=5 // pred_check
        _
      $region10: #{tpu_custom_call.1} parent=5 // pred_check_branch
        %132 = sbr.rel (%p129) target = $region12
      $region11: #{tpu_custom_call.1} parent=5 // pred_region
        %s133 = ssub.s32 %s17, 1
      $region12: #{tpu_custom_call.1} parent=5 // pred_fallthru
        _
      %p134 = scmp.lt.s32.totalorder %s17, 2
      // Predicated region
      $region13: #{tpu_custom_call.1} parent=5 // pred_check
        %p135 = pneg %p134
      $region14: #{tpu_custom_call.1} parent=5 // pred_check_branch
        %137 = sbr.rel (%p135) target = $region16
      $region15: #{tpu_custom_call.1} parent=5 // pred_region
        // Predicated region
        $region17: #{tpu_custom_call.1} parent=15 // pred_check
          %p138 = pneg %p55
        $region18: #{tpu_custom_call.1} parent=15 // pred_check_branch
          %140 = sbr.rel (%p138) target = $region20
        $region19: #{tpu_custom_call.1} parent=15 // pred_region
          %s141 = sand.u32 %s45, 1
          %s142 = scalar_lea.sflag [#allocation4], %s141
          %s143 = sand.u32 %s45, 1
          %s144 = smul.addr %s143, 16
          %s145 = scalar_lea.vmem [#allocation3], %s144
          %s146 = sadd.s32 %s24, %s25
          %p147 = scmp.lt.s32.totalorder %s146, 0
          %s148 = scalar_select %p147, %s146, 0
          %s149 = smul.u32 2, %s148
          %s151 = ssub.s32 256, 256
          %152 = vsyncadd %s142, %s151
          %s153 = smul.addr %s149, 128
          %s154 = scalar_lea.hbm %s0, %s153
          %s155 = sshll.u32 %s145, 4
          %s156 = int_to_ptr.vmem [resolvable:$true] %s155
          %161 = dma.hbm_to_vmem [thread:$0]  %s154, 256, %s156, %s142, 128, 128, 8
        $region20: #{tpu_custom_call.1} parent=15 // pred_fallthru
          _
        // Predicated region
        $region21: #{tpu_custom_call.1} parent=15 // pred_check
          %p162 = pneg %p87
        $region22: #{tpu_custom_call.1} parent=15 // pred_check_branch
          %164 = sbr.rel (%p162) target = $region24
        $region23: #{tpu_custom_call.1} parent=15 // pred_region
          %s165 = sand.u32 %s77, 1
          %s166 = scalar_lea.sflag [#allocation7], %s165
          %s167 = sand.u32 %s77, 1
          %s168 = smul.addr %s167, 16
          %s169 = scalar_lea.vmem [#allocation6], %s168
          %s170 = sadd.s32 %s24, %s25
          %p171 = scmp.lt.s32.totalorder %s170, 0
          %s172 = scalar_select %p171, %s170, 0
          %s173 = smul.u32 2, %s172
          %s175 = ssub.s32 256, 256
          %176 = vsyncadd %s166, %s175
          %s177 = smul.addr %s173, 128
          %s178 = scalar_lea.hbm %s1, %s177
          %s179 = sshll.u32 %s169, 4
          %s180 = int_to_ptr.vmem [resolvable:$true] %s179
          %185 = dma.hbm_to_vmem [thread:$0]  %s178, 256, %s180, %s166, 128, 128, 8
        $region24: #{tpu_custom_call.1} parent=15 // pred_fallthru
          _
      $region16: #{tpu_custom_call.1} parent=5 // pred_fallthru
        _
      %p186 = scmp.le.s32.totalorder 1, %s17
      %p187 = scmp.lt.s32.totalorder %s17, 3
      %p188 = pnand %p186, %p187
      %p189 = pneg %p188
      // Predicated region
      $region25: #{tpu_custom_call.1} parent=5 // pred_check
        _
      $region26: #{tpu_custom_call.1} parent=5 // pred_check_branch
        %191 = sbr.rel (%p188) target = $region28
      $region27: #{tpu_custom_call.1} parent=5 // pred_region
        %s192 = ssub.s32 %s17, 1
        %s193 = sand.u32 %s48, 1
        %s194 = scalar_lea.sflag [#allocation4], %s193
        %s195 = sand.u32 %s48, 1
        %s196 = smul.addr %s195, 16
        %s197 = scalar_lea.vmem [#allocation3], %s196
        // Predicated region
        $region29: #{tpu_custom_call.1} parent=27 // pred_check
          %p198 = pneg %p61
        $region30: #{tpu_custom_call.1} parent=27 // pred_check_branch
          %200 = sbr.rel (%p198) target = $region32
        $region31: #{tpu_custom_call.1} parent=27 // pred_region
          %201 = dma.done %s194, 256
        $region32: #{tpu_custom_call.1} parent=27 // pred_fallthru
          _
        %s202 = sand.u32 %s80, 1
        %s203 = scalar_lea.sflag [#allocation7], %s202
        %s204 = sand.u32 %s80, 1
        %s205 = smul.addr %s204, 16
        %s206 = scalar_lea.vmem [#allocation6], %s205
        // Predicated region
        $region33: #{tpu_custom_call.1} parent=27 // pred_check
          %p207 = pneg %p93
        $region34: #{tpu_custom_call.1} parent=27 // pred_check_branch
          %209 = sbr.rel (%p207) target = $region36
        $region35: #{tpu_custom_call.1} parent=27 // pred_region
          %210 = dma.done %s203, 256
        $region36: #{tpu_custom_call.1} parent=27 // pred_fallthru
          _
        %s211 = sand.u32 %s48, 1
        %s212 = scalar_lea.sflag [#allocation4], %s211
        %s213 = sand.u32 %s48, 1
        %s214 = smul.addr %s213, 16
        %s215 = scalar_lea.vmem [#allocation3], %s214
        %p216 = pneg %p61
        %p217 = pneg %p58
        %s218 = sand.u32 %s80, 1
        %s219 = scalar_lea.sflag [#allocation7], %s218
        %s220 = sand.u32 %s80, 1
        %s221 = smul.addr %s220, 16
        %s222 = scalar_lea.vmem [#allocation6], %s221
        %p223 = pneg %p93
        %p224 = pneg %p90
        %p225 = pneg %p119
        %p226 = pneg %p116
        %s227 = sand.u32 %s106, 1
        %s228 = scalar_lea.sflag [#allocation5], %s227
        %s229 = sand.u32 %s106, 1
        %s230 = smul.addr %s229, 8
        %s231 = scalar_lea.vmem [#allocation8], %s230
        %s232 = sadd.s32 %s26, %s27
        %p233 = scmp.lt.s32.totalorder %s232, 0
        %s234 = scalar_select %p233, %s232, 0
        %s235 = smul.u32 2, %s234
        %s236 = sadd.s32 %s26, %s27
        %p237 = scmp.lt.s32.totalorder %s236, 0
        %s238 = scalar_select %p237, %s236, 0
        %s239 = smul.u32 2, %s238
        %p240 = scmp.eq.s32.totalorder %s27, 0
        // Predicated region
        $region37: #{tpu_custom_call.1} parent=27 // pred_check
          %p241 = pneg %p240
        $region38: #{tpu_custom_call.1} parent=27 // pred_check_branch
          %243 = sbr.rel (%p241) target = $region40
        $region39: #{tpu_custom_call.1} parent=27 // pred_region
          %244 = vst [vmem:[#allocation2] sm:$0xff] 0.0
        $region40: #{tpu_custom_call.1} parent=27 // pred_fallthru
          _
        %v245 = vld [vmem:[%s197] sm:$0xff]
        %v246 = vld [vmem:[%s197 + $0x8] sm:$0xff]
        %v247 = vld [vmem:[%s206] sm:$0xff]
        %v248 = vld [vmem:[%s206 + $0x8] sm:$0xff]
        %v249 = vlog2.pop %v245
        %v250 = vmul.f32 %v249, 0.6931472
        %v251 = vlog2.pop %v246
        %v252 = vmul.f32 %v251, 0.6931472
        %v253 = vmax.f32 %v250, -100.0
        %v254 = vmax.f32 %v252, -100.0
        %v255 = vsub.f32 1.0, %v245
        %v256 = vsub.f32 1.0, %v246
        %v257 = vlog2.pop %v255
        %v258 = vmul.f32 %v257, 0.6931472
        %v259 = vlog2.pop %v256
        %v260 = vmul.f32 %v259, 0.6931472
        %v261 = vmax.f32 %v258, -100.0
        %v262 = vmax.f32 %v260, -100.0
        %v263 = vmul.f32 %v247, %v253
        %v264 = vmul.f32 %v248, %v254
        %v265 = vsub.f32 1.0, %v247
        %v266 = vsub.f32 1.0, %v248
        %v267 = vmul.f32 %v265, %v261
        %v268 = vmul.f32 %v266, %v262
        %v269 = vadd.f32 %v263, %v267
        %v270 = vadd.f32 %v264, %v268
        %v271 = vsub.f32 0.0, %v269
        %v272 = vsub.f32 0.0, %v270
        %v273 = vsub.f32 0.0, %v271
        %v274 = vsub.f32 0.0, %v272
        %v275 = vmul.f32 %v273, 1.442695
        %v276 = vpow.pop %v275
        %v277 = vmul.f32 %v274, 1.442695
        %v278 = vpow.pop %v277
        %v279 = vsub.f32 1.0, %v276
        %v280 = vsub.f32 1.0, %v278
        %v281 = vmax.f32 %v279, 0.0
        %v282 = vmax.f32 %v280, 0.0
        %v283 = vrsqrt.pop %v281
        %v284 = vmul.f32 %v281, %v283
        %vm285 = vcmp.eq.f32.partialorder %v281, inf
        %v286 = vsel %vm285, %v281, %v284
        %vm287 = vcmp.eq.f32.partialorder %v281, 0.0
        %v288 = vand.u32 %v281, 2147483648
        %v289 = vsel %vm287, %v288, %v286
        %v290 = vrsqrt.pop %v282
        %v291 = vmul.f32 %v282, %v290
        %vm292 = vcmp.eq.f32.partialorder %v282, inf
        %v293 = vsel %vm292, %v282, %v291
        %vm294 = vcmp.eq.f32.partialorder %v282, 0.0
        %v295 = vand.u32 %v282, 2147483648
        %v296 = vsel %vm294, %v295, %v293
        %v297 = vmul.f32 %v281, %v289
        %v298 = vmul.f32 %v282, %v296
        %v299 = vmul.f32 %v297, 0.25
        %v300 = vmul.f32 %v298, 0.25
        %v301 = vmul.f32 %v299, %v271
        %v302 = vmul.f32 %v300, %v272
        %s303 = sadd.s32 %s26, %s27
        %v304 = vlaneseq
        %v305 = vshrl.u32 %v304, 7
        %v306 = vadd.s32 %v305, 8
        %v307 = vlaneseq
        %v308 = vand.u32 %v307, 127
        %s309 = smul.u32 %s303, 2048
        %v310 = vmul.u32 %v305, 128
        %v311 = vmul.u32 %v306, 128
        %v312 = vstv %s309
        %v313 = vadd.s32 %v312, %v310
        %v314 = vadd.s32 %v312, %v311
        %v315 = vadd.s32 %v313, %v308
        %v316 = vadd.s32 %v314, %v308
        %vm317 = vcmp.lt.s32.totalorder %v315, 2048
        %vm318 = vcmp.lt.s32.totalorder %v316, 2048
        %v319 = vsel %vm317, %v301, 0.0
        %v320 = vsel %vm318, %v302, 0.0
        %v321 = vld [vmem:[#allocation2] sm:$0xff]
        %v322 = vadd.f32 %v319, %v320
        %v323 = vadd.f32 %v321, %v322
        %324 = vst [vmem:[#allocation2] sm:$0xff] %v323
        // Predicated region
        $region41: #{tpu_custom_call.1} parent=27 // pred_check
          %p325 = pneg %p240
        $region42: #{tpu_custom_call.1} parent=27 // pred_check_branch
          %327 = sbr.rel (%p325) target = $region44
        $region43: #{tpu_custom_call.1} parent=27 // pred_region
          %v328 = vld [vmem:[#allocation2] sm:$0xff]
          %329 = vst [vmem:[%s231] sm:$0xff] %v328
        $region44: #{tpu_custom_call.1} parent=27 // pred_fallthru
          _
        %s330 = sand.u32 %s106, 1
        %s331 = scalar_lea.sflag [#allocation5], %s330
        %s332 = sand.u32 %s106, 1
        %s333 = smul.addr %s332, 8
        %s334 = scalar_lea.vmem [#allocation8], %s333
        // Predicated region
        $region45: #{tpu_custom_call.1} parent=27 // pred_check
          %p335 = pneg %p116
        $region46: #{tpu_custom_call.1} parent=27 // pred_check_branch
          %337 = sbr.rel (%p335) target = $region48
        $region47: #{tpu_custom_call.1} parent=27 // pred_region
          %s339 = ssub.s32 128, 128
          %340 = vsyncadd %s331, %s339
          %s341 = smul.addr %s26, 128
          %s342 = scalar_lea.hbm %s2, %s341
          %s344 = sshll.u32 %s334, 4
          %s345 = int_to_ptr.vmem [resolvable:$true] %s344
          %347 = dma.vmem_to_hbm [thread:$0]  %s345, 128, %s342, %s331
        $region48: #{tpu_custom_call.1} parent=27 // pred_fallthru
          _
      $region28: #{tpu_custom_call.1} parent=5 // pred_fallthru
        _
      %p348 = scmp.le.s32.totalorder 2, %s17
      // Predicated region
      $region49: #{tpu_custom_call.1} parent=5 // pred_check
        %p349 = pneg %p348
      $region50: #{tpu_custom_call.1} parent=5 // pred_check_branch
        %351 = sbr.rel (%p349) target = $region52
      $region51: #{tpu_custom_call.1} parent=5 // pred_region
        %s352 = ssub.s32 %s17, 2
        // Predicated region
        $region53: #{tpu_custom_call.1} parent=51 // pred_check
          %p353 = pneg %p122
        $region54: #{tpu_custom_call.1} parent=51 // pred_check_branch
          %355 = sbr.rel (%p353) target = $region56
        $region55: #{tpu_custom_call.1} parent=51 // pred_region
          %s356 = sand.u32 %s107, 1
          %s357 = scalar_lea.sflag [#allocation5], %s356
          %s358 = sand.u32 %s107, 1
          %s359 = smul.addr %s358, 8
          %s360 = scalar_lea.vmem [#allocation8], %s359
          %361 = dma.done %s357, 128
        $region56: #{tpu_custom_call.1} parent=51 // pred_fallthru
          _
      $region52: #{tpu_custom_call.1} parent=5 // pred_fallthru
        _
    $region6: #{tpu_custom_call.1} parent=1 // loop_footer
      %s21 = sadd.s32 1, %s17
    $region7: #{tpu_custom_call.1} parent=1 // loop_footer_branch
      %16 = sbr.rel target = $region3
    $region8: #{tpu_custom_call.1} parent=1 // loop_exit
      _
    %362 = vsyncpa [#allocation4], 1
    %s363 = scalar_lea.sflag [#allocation4], 1
    %364 = vsyncpa %s363, 1
    %365 = vsyncpa [#allocation7], 1
    %s366 = scalar_lea.sflag [#allocation7], 1
    %367 = vsyncpa %s366, 1
    %368 = vsyncpa [#allocation5], 1
    %s369 = scalar_lea.sflag [#allocation5], 1
    %370 = vsyncpa %s369, 1

</llo_original>
